<compile_context>
chip_gen: v5e
topology: v5e:2x2
jax: 0.10.0
libtpu: 0.0.40
codegen_flags: <defaults>
</compile_context>

<pallas_src>
import functools

import jax
import jax.numpy as jnp
from jax.experimental import pallas as pl
from jax.experimental.pallas import tpu as pltpu

HIDDEN = 128   # per-head hidden width, fixed by the PyTorch module
LANES = 128    # TPU vreg lane width


def _round_up(n, m):
    return ((n + m - 1) // m) * m


def _bcq_kernel(x_ref, w1_ref, b1_ref, w2_ref, b2_ref, out_ref, pack_ref):
    # x arrives f32; cast to the MXU operand dtype in-kernel (hidden under DMA).
    x = x_ref[...].astype(w1_ref.dtype)                             # (TB, num_obs)

    # --- fused layer 1: [w1 | iw1] -> one (num_obs, 2H) matmul, f32 accumulation
    h = jnp.dot(x, w1_ref[...], preferred_element_type=jnp.float32) + b1_ref[...]
    h = jnp.maximum(h, 0.0)                                         # (TB, 2H) f32

    # --- fused layer 2: block-diagonal (2H, 2A) matmul
    y = jnp.dot(h.astype(w2_ref.dtype), w2_ref[...],
                preferred_element_type=jnp.float32) + b2_ref[...]   # (TB, 2A) f32

    tb, two_a = y.shape
    A = two_a // 2

    # Lane-masked log-softmax over the imitation half; the q half passes through.
    # (Avoids sub-128-lane slices + concatenate relayouts.)
    col = jax.lax.broadcasted_iota(jnp.int32, y.shape, 1)
    is_logit = col >= A
    neg_inf = jnp.float32(-jnp.inf)
    m = jnp.max(jnp.where(is_logit, y, neg_inf), axis=1, keepdims=True)
    e = jnp.exp(jnp.where(is_logit, y, neg_inf) - m)                # q lanes -> 0
    lse = jnp.log(jnp.sum(e, axis=1, keepdims=True))
    packed = jnp.where(is_logit, y - m - lse, y)                    # [q | logp] (TB, 2A)

    # Lane-densify the store: fold P = out_lanes // 2A consecutive batch rows into
    # one 128-lane output row (sublane-strided reads; XLU/VPU slots are idle here).
    P = out_ref.shape[1] // two_a
    if P > 1:
        rows = tb // P
        pack_ref[...] = packed
        for j in range(P):
            out_ref[:, pl.ds(j * two_a, two_a)] = (
                pack_ref[pl.ds(j, rows, stride=P), :].astype(out_ref.dtype))
    else:
        out_ref[...] = packed.astype(out_ref.dtype)


def prepare_fused_params(params, mxu_dtype=jnp.bfloat16):
    """Fuse the two heads once, outside the kernel (layout plumbing, not compute)."""
    w1, iw1 = params["w1"], params["iw1"]
    w2, iw2 = params["w2"], params["iw2"]
    hidden = w1.shape[1]
    A = w2.shape[1]

    w1cat = jnp.concatenate([w1, iw1], axis=1).astype(mxu_dtype)        # (num_obs, 2H)
    b1cat = jnp.concatenate([params["b1"], params["ib1"]], axis=1)      # (1, 2H) f32

    zeros = jnp.zeros((hidden, A), jnp.float32)
    w2blk = jnp.concatenate(
        [jnp.concatenate([w2, zeros], axis=1),
         jnp.concatenate([zeros, iw2], axis=1)], axis=0).astype(mxu_dtype)  # (2H, 2A)
    b2cat = jnp.concatenate([params["b2"], params["ib2"]], axis=1)      # (1, 2A) f32

    return {"w1cat": w1cat, "b1cat": b1cat, "w2blk": w2blk, "b2cat": b2cat}


def _pick_tiles(B, two_a, tb_cap=8192):
    """Pick (tb, pack): big tiles, >= 2 grid steps when B allows, packing-friendly."""
    pack = LANES // two_a if (two_a <= LANES and LANES % two_a == 0) else 1
    row_mult = max(32, 8 * pack)              # out-block sublane dim stays a multiple of 8
    half = -(-B // 2)                         # cdiv(B, 2): target >= 2 steps (v7x megacore)
    k = max(1, -(-half // tb_cap))            # tiles per half so tb <= tb_cap
    tb = _round_up(max(1, -(-B // (2 * k))), row_mult)
    tb = min(_round_up(tb_cap, row_mult), tb)
    return tb, pack


@functools.partial(jax.jit, static_argnames=("tb",))
def bcq_forward(x, fused, *, tb=None):
    """x: (B, num_obs) f32.  Returns (q_values, log_probs), each (B, A) f32."""
    B, num_obs = x.shape
    two_h = fused["w1cat"].shape[1]
    two_a = fused["w2blk"].shape[1]
    A = two_a // 2

    tb_auto, pack = _pick_tiles(B, two_a)
    if tb is None:
        tb = tb_auto
    else:
        p = LANES // two_a if (two_a <= LANES and LANES % two_a == 0) else 1
        pack = p if (p > 1 and tb % (8 * p) == 0) else 1

    Bp = _round_up(B, tb)
    if Bp != B:
        # Tail-only pad (skipped when B % tb == 0); padded rows are dropped below.
        x = jnp.pad(x, ((0, Bp - B), (0, 0)))
    grid = (Bp // tb,)

    out_rows = Bp // pack
    out_cols = pack * two_a
    w_itemsize = jnp.dtype(fused["w1cat"].dtype).itemsize

    cost = pl.CostEstimate(
        flops=2 * Bp * (num_obs * two_h + two_h * two_a),
        transcendentals=Bp * (A + 1),                       # exp per action + log
        bytes_accessed=(Bp * num_obs * 4                    # x (f32) read
                        + Bp * two_a * 4                    # packed output write
                        + (num_obs * two_h + two_h * two_a) * w_itemsize
                        + (two_h + two_a) * 4),             # weights + biases
    )

    packed = pl.pallas_call(
        _bcq_kernel,
        out_shape=jax.ShapeDtypeStruct((out_rows, out_cols), jnp.float32),
        grid_spec=pltpu.PrefetchScalarGridSpec(
            num_scalar_prefetch=0,
            grid=grid,
            in_specs=[
                pl.BlockSpec((tb, num_obs), lambda i: (i, 0)),          # x: batch-tiled
                pl.BlockSpec((num_obs, two_h), lambda i: (0, 0)),       # w1cat (resident)
                pl.BlockSpec((1, two_h), lambda i: (0, 0)),             # b1cat (resident)
                pl.BlockSpec((two_h, two_a), lambda i: (0, 0)),         # w2blk (resident)
                pl.BlockSpec((1, two_a), lambda i: (0, 0)),             # b2cat (resident)
            ],
            out_specs=pl.BlockSpec((tb // pack, out_cols), lambda i: (i, 0)),
            scratch_shapes=[pltpu.VMEM((tb, two_a), jnp.float32)],      # packing scratch
        ),
        compiler_params=pltpu.CompilerParams(
            dimension_semantics=("parallel",),        # megacore-shardable (grid >= 2)
            vmem_limit_bytes=48 * 1024 * 1024,        # headroom vs v5e 16 MiB default
        ),
        cost_estimate=cost,
    )(x, fused["w1cat"], fused["b1cat"], fused["w2blk"], fused["b2cat"])

    flat = packed.reshape(Bp, two_a)      # free, contiguity-preserving reshape
    q = flat[:B, :A]
    logp = flat[:B, A:]
    return q, logp


def init_params(key, num_obs, num_actions, hidden=HIDDEN):
    """Deterministic synthetic parameter init (shapes match the PyTorch module)."""
    ks = jax.random.split(key, 8)
    s1 = 1.0 / jnp.sqrt(num_obs)
    s2 = 1.0 / jnp.sqrt(hidden)
    return {
        # policy head
        "w1": jax.random.uniform(ks[0], (num_obs, hidden), jnp.float32, -s1, s1),
        "b1": jax.random.uniform(ks[1], (1, hidden), jnp.float32, -s1, s1),
        "w2": jax.random.uniform(ks[2], (hidden, num_actions), jnp.float32, -s2, s2),
        "b2": jax.random.uniform(ks[3], (1, num_actions), jnp.float32, -s2, s2),
        # imitation head
        "iw1": jax.random.uniform(ks[4], (num_obs, hidden), jnp.float32, -s1, s1),
        "ib1": jax.random.uniform(ks[5], (1, hidden), jnp.float32, -s1, s1),
        "iw2": jax.random.uniform(ks[6], (hidden, num_actions), jnp.float32, -s2, s2),
        "ib2": jax.random.uniform(ks[7], (1, num_actions), jnp.float32, -s2, s2),
    }


def _reference(x, p):
    h = jnp.maximum(x @ p["w1"] + p["b1"], 0.0)
    q = h @ p["w2"] + p["b2"]
    hi = jnp.maximum(x @ p["iw1"] + p["ib1"], 0.0)
    logits = hi @ p["iw2"] + p["ib2"]
    return q, jax.nn.log_softmax(logits, axis=1)


if __name__ == "__main__":
    B, num_obs, num_actions = 8, 32, 8

    key = jax.random.PRNGKey(0)
    k_x, k_p = jax.random.split(key)
    x = jax.random.normal(k_x, (B, num_obs), jnp.float32)
    params = init_params(k_p, num_obs, num_actions)

    q_ref, logp_ref = _reference(x, params)

    # f32 MXU path: tight check of the fused-kernel semantics.
    fused_f32 = prepare_fused_params(params, jnp.float32)
    q32, logp32 = bcq_forward(x, fused_f32)
    jax.block_until_ready((q32, logp32))
    assert q32.shape == (B, num_actions) and logp32.shape == (B, num_actions)
    assert jnp.allclose(q32, q_ref, atol=1e-5, rtol=1e-5)
    assert jnp.allclose(logp32, logp_ref, atol=1e-5, rtol=1e-5)

    # bf16 MXU path (performance default): looser tolerance vs f32 reference.
    fused_bf16 = prepare_fused_params(params, jnp.bfloat16)
    qb, logpb = bcq_forward(x, fused_bf16)
    jax.block_until_ready((qb, logpb))
    assert jnp.allclose(qb, q_ref, atol=1e-1, rtol=1e-1)
    assert jnp.allclose(logpb, logp_ref, atol=1e-1, rtol=1e-1)

    print("KERNEL_OK")
</pallas_src>

<mosaic_0001>
module attributes {stable_mosaic.version = 11 : i64} {
  func.func @_bcq_kernel(%arg0: i32, %arg1: memref<64x32xf32, #tpu.memory_space<vmem>>, %arg2: memref<32x256xf32, #tpu.memory_space<vmem>>, %arg3: memref<1x256xf32, #tpu.memory_space<vmem>>, %arg4: memref<256x16xf32, #tpu.memory_space<vmem>>, %arg5: memref<1x16xf32, #tpu.memory_space<vmem>>, %arg6: memref<8x128xf32, #tpu.memory_space<vmem>>, %arg7: memref<64x16xf32, #tpu.memory_space<vmem>>) attributes {dimension_semantics = [#tpu.dimension_semantics<parallel>], iteration_bounds = array<i64: 1>, scalar_prefetch = 0 : i64, scratch_operands = 1 : i64, tpu.core_type = #tpu.core_type<tc>, window_params = [{transform_indices = @transform_0, window_bounds = array<i64: 64, 32>}, {pipeline_mode = #tpu.pipeline_mode<synchronous>, transform_indices = @transform_1, window_bounds = array<i64: 32, 256>}, {pipeline_mode = #tpu.pipeline_mode<synchronous>, transform_indices = @transform_2, window_bounds = array<i64: 1, 256>}, {pipeline_mode = #tpu.pipeline_mode<synchronous>, transform_indices = @transform_3, window_bounds = array<i64: 256, 16>}, {pipeline_mode = #tpu.pipeline_mode<synchronous>, transform_indices = @transform_4, window_bounds = array<i64: 1, 16>}, {transform_indices = @transform_5, window_bounds = array<i64: 8, 128>}]} {
    %c0 = arith.constant 0 : index
    %c0_0 = arith.constant 0 : index
    %0 = vector.load %arg1[%c0, %c0_0] : memref<64x32xf32, #tpu.memory_space<vmem>>, vector<64x32xf32>
    %c0_1 = arith.constant 0 : index
    %c0_2 = arith.constant 0 : index
    %1 = vector.load %arg2[%c0_1, %c0_2] : memref<32x256xf32, #tpu.memory_space<vmem>>, vector<32x256xf32>
    %cst = arith.constant dense<0.000000e+00> : vector<64x256xf32>
    %2 = tpu.matmul %0, %1, %cst {dimension_numbers = #tpu.dot_dimension_numbers<[1], [0], [0], [1], [0, 0, 1, 1], [], []>} : vector<64x32xf32>, vector<32x256xf32>, vector<64x256xf32> -> vector<64x256xf32>
    %c0_3 = arith.constant 0 : index
    %c0_4 = arith.constant 0 : index
    %3 = vector.load %arg3[%c0_3, %c0_4] : memref<1x256xf32, #tpu.memory_space<vmem>>, vector<1x256xf32>
    %4 = vector.broadcast %3 : vector<1x256xf32> to vector<64x256xf32>
    %5 = arith.addf %2, %4 : vector<64x256xf32>
    %cst_5 = arith.constant 0.000000e+00 : f32
    %6 = vector.broadcast %cst_5 : f32 to vector<64x256xf32>
    %7 = arith.maximumf %5, %6 : vector<64x256xf32>
    %c0_6 = arith.constant 0 : index
    %c0_7 = arith.constant 0 : index
    %8 = vector.load %arg4[%c0_6, %c0_7] : memref<256x16xf32, #tpu.memory_space<vmem>>, vector<256x16xf32>
    %cst_8 = arith.constant dense<0.000000e+00> : vector<64x16xf32>
    %9 = tpu.matmul %7, %8, %cst_8 {dimension_numbers = #tpu.dot_dimension_numbers<[1], [0], [0], [1], [0, 0, 1, 1], [], []>} : vector<64x256xf32>, vector<256x16xf32>, vector<64x16xf32> -> vector<64x16xf32>
    %c0_9 = arith.constant 0 : index
    %c0_10 = arith.constant 0 : index
    %10 = vector.load %arg5[%c0_9, %c0_10] : memref<1x16xf32, #tpu.memory_space<vmem>>, vector<1x16xf32>
    %11 = vector.broadcast %10 : vector<1x16xf32> to vector<64x16xf32>
    %12 = arith.addf %9, %11 : vector<64x16xf32>
    %13 = tpu.iota {dimensions = array<i32: 1>} : vector<64x16xi32>
    %c8_i32 = arith.constant 8 : i32
    %14 = vector.broadcast %c8_i32 : i32 to vector<64x16xi32>
    %15 = arith.cmpi sge, %13, %14 : vector<64x16xi32>
    %cst_11 = arith.constant 0xFF800000 : f32
    %16 = vector.broadcast %cst_11 : f32 to vector<64x16xf32>
    %17 = arith.select %15, %12, %16 : vector<64x16xi1>, vector<64x16xf32>
    %cst_12 = arith.constant dense<0xFF800000> : vector<64xf32>
    %18 = vector.multi_reduction <maximumf>, %17, %cst_12 [1] : vector<64x16xf32> to vector<64xf32>
    %19 = vector.shape_cast %18 : vector<64xf32> to vector<64x1xf32>
    %cst_13 = arith.constant 0xFF800000 : f32
    %20 = vector.broadcast %cst_13 : f32 to vector<64x16xf32>
    %21 = arith.select %15, %12, %20 : vector<64x16xi1>, vector<64x16xf32>
    %22 = vector.broadcast %19 : vector<64x1xf32> to vector<64x16xf32>
    %23 = arith.subf %21, %22 : vector<64x16xf32>
    %24 = math.exp %23 : vector<64x16xf32>
    %cst_14 = arith.constant dense<0.000000e+00> : vector<64xf32>
    %25 = vector.multi_reduction <add>, %24, %cst_14 [1] : vector<64x16xf32> to vector<64xf32>
    %26 = vector.shape_cast %25 : vector<64xf32> to vector<64x1xf32>
    %27 = math.log %26 : vector<64x1xf32>
    %28 = vector.broadcast %19 : vector<64x1xf32> to vector<64x16xf32>
    %29 = arith.subf %12, %28 : vector<64x16xf32>
    %30 = vector.broadcast %27 : vector<64x1xf32> to vector<64x16xf32>
    %31 = arith.subf %29, %30 : vector<64x16xf32>
    %32 = arith.select %15, %31, %12 : vector<64x16xi1>, vector<64x16xf32>
    %c0_15 = arith.constant 0 : index
    %c0_16 = arith.constant 0 : index
    %33 = vector.load %arg7[%c0_15, %c0_16] : memref<64x16xf32, #tpu.memory_space<vmem>>, vector<64x16xf32>
    tpu.vector_store %arg7[%c0_15, %c0_16], %32 {strides = array<i32>} : memref<64x16xf32, #tpu.memory_space<vmem>>, vector<64x16xf32>,
    %c0_17 = arith.constant 0 : index
    %c0_18 = arith.constant 0 : index
    %34 = tpu.strided_load %arg7[%c0_17, %c0_18] {strides = array<i32: 8, 1>} : memref<64x16xf32, #tpu.memory_space<vmem>>, vector<8x16xf32>
    %c0_19 = arith.constant 0 : index
    %c0_20 = arith.constant 0 : index
    %35 = vector.load %arg6[%c0_19, %c0_20] : memref<8x128xf32, #tpu.memory_space<vmem>>, vector<8x16xf32>
    tpu.vector_store %arg6[%c0_19, %c0_20], %34 {strides = array<i32>} : memref<8x128xf32, #tpu.memory_space<vmem>>, vector<8x16xf32>,
    %c1 = arith.constant 1 : index
    %c0_21 = arith.constant 0 : index
    %36 = tpu.strided_load %arg7[%c1, %c0_21] {strides = array<i32: 8, 1>} : memref<64x16xf32, #tpu.memory_space<vmem>>, vector<8x16xf32>
    %c0_22 = arith.constant 0 : index
    %c16 = arith.constant 16 : index
    %37 = vector.load %arg6[%c0_22, %c16] : memref<8x128xf32, #tpu.memory_space<vmem>>, vector<8x16xf32>
    tpu.vector_store %arg6[%c0_22, %c16], %36 {strides = array<i32>} : memref<8x128xf32, #tpu.memory_space<vmem>>, vector<8x16xf32>,
    %c2 = arith.constant 2 : index
    %c0_23 = arith.constant 0 : index
    %38 = tpu.strided_load %arg7[%c2, %c0_23] {strides = array<i32: 8, 1>} : memref<64x16xf32, #tpu.memory_space<vmem>>, vector<8x16xf32>
    %c0_24 = arith.constant 0 : index
    %c32 = arith.constant 32 : index
    %39 = vector.load %arg6[%c0_24, %c32] : memref<8x128xf32, #tpu.memory_space<vmem>>, vector<8x16xf32>
    tpu.vector_store %arg6[%c0_24, %c32], %38 {strides = array<i32>} : memref<8x128xf32, #tpu.memory_space<vmem>>, vector<8x16xf32>,
    %c3 = arith.constant 3 : index
    %c0_25 = arith.constant 0 : index
    %40 = tpu.strided_load %arg7[%c3, %c0_25] {strides = array<i32: 8, 1>} : memref<64x16xf32, #tpu.memory_space<vmem>>, vector<8x16xf32>
    %c0_26 = arith.constant 0 : index
    %c48 = arith.constant 48 : index
    %41 = vector.load %arg6[%c0_26, %c48] : memref<8x128xf32, #tpu.memory_space<vmem>>, vector<8x16xf32>
    tpu.vector_store %arg6[%c0_26, %c48], %40 {strides = array<i32>} : memref<8x128xf32, #tpu.memory_space<vmem>>, vector<8x16xf32>,
    %c4 = arith.constant 4 : index
    %c0_27 = arith.constant 0 : index
    %42 = tpu.strided_load %arg7[%c4, %c0_27] {strides = array<i32: 8, 1>} : memref<64x16xf32, #tpu.memory_space<vmem>>, vector<8x16xf32>
    %c0_28 = arith.constant 0 : index
    %c64 = arith.constant 64 : index
    %43 = vector.load %arg6[%c0_28, %c64] : memref<8x128xf32, #tpu.memory_space<vmem>>, vector<8x16xf32>
    tpu.vector_store %arg6[%c0_28, %c64], %42 {strides = array<i32>} : memref<8x128xf32, #tpu.memory_space<vmem>>, vector<8x16xf32>,
    %c5 = arith.constant 5 : index
    %c0_29 = arith.constant 0 : index
    %44 = tpu.strided_load %arg7[%c5, %c0_29] {strides = array<i32: 8, 1>} : memref<64x16xf32, #tpu.memory_space<vmem>>, vector<8x16xf32>
    %c0_30 = arith.constant 0 : index
    %c80 = arith.constant 80 : index
    %45 = vector.load %arg6[%c0_30, %c80] : memref<8x128xf32, #tpu.memory_space<vmem>>, vector<8x16xf32>
    tpu.vector_store %arg6[%c0_30, %c80], %44 {strides = array<i32>} : memref<8x128xf32, #tpu.memory_space<vmem>>, vector<8x16xf32>,
    %c6 = arith.constant 6 : index
    %c0_31 = arith.constant 0 : index
    %46 = tpu.strided_load %arg7[%c6, %c0_31] {strides = array<i32: 8, 1>} : memref<64x16xf32, #tpu.memory_space<vmem>>, vector<8x16xf32>
    %c0_32 = arith.constant 0 : index
    %c96 = arith.constant 96 : index
    %47 = vector.load %arg6[%c0_32, %c96] : memref<8x128xf32, #tpu.memory_space<vmem>>, vector<8x16xf32>
    tpu.vector_store %arg6[%c0_32, %c96], %46 {strides = array<i32>} : memref<8x128xf32, #tpu.memory_space<vmem>>, vector<8x16xf32>,
    %c7 = arith.constant 7 : index
    %c0_33 = arith.constant 0 : index
    %48 = tpu.strided_load %arg7[%c7, %c0_33] {strides = array<i32: 8, 1>} : memref<64x16xf32, #tpu.memory_space<vmem>>, vector<8x16xf32>
    %c0_34 = arith.constant 0 : index
    %c112 = arith.constant 112 : index
    %49 = vector.load %arg6[%c0_34, %c112] : memref<8x128xf32, #tpu.memory_space<vmem>>, vector<8x16xf32>
    tpu.vector_store %arg6[%c0_34, %c112], %48 {strides = array<i32>} : memref<8x128xf32, #tpu.memory_space<vmem>>, vector<8x16xf32>,
    return
  }
  func.func @transform_0(%arg0: i32) -> (i32, i32) {
    %c0_i32 = arith.constant 0 : i32
    %c0_i32_0 = arith.constant 0 : i32
    return %arg0, %c0_i32 : i32, i32
  }
  func.func @transform_1(%arg0: i32) -> (i32, i32) {
    %c0_i32 = arith.constant 0 : i32
    %c0_i32_0 = arith.constant 0 : i32
    %c0_i32_1 = arith.constant 0 : i32
    return %c0_i32, %c0_i32_0 : i32, i32
  }
  func.func @transform_2(%arg0: i32) -> (i32, i32) {
    %c0_i32 = arith.constant 0 : i32
    %c0_i32_0 = arith.constant 0 : i32
    %c0_i32_1 = arith.constant 0 : i32
    return %c0_i32, %c0_i32_0 : i32, i32
  }
  func.func @transform_3(%arg0: i32) -> (i32, i32) {
    %c0_i32 = arith.constant 0 : i32
    %c0_i32_0 = arith.constant 0 : i32
    %c0_i32_1 = arith.constant 0 : i32
    return %c0_i32, %c0_i32_0 : i32, i32
  }
  func.func @transform_4(%arg0: i32) -> (i32, i32) {
    %c0_i32 = arith.constant 0 : i32
    %c0_i32_0 = arith.constant 0 : i32
    %c0_i32_1 = arith.constant 0 : i32
    return %c0_i32, %c0_i32_0 : i32, i32
  }
  func.func @transform_5(%arg0: i32) -> (i32, i32) {
    %c0_i32 = arith.constant 0 : i32
    %c0_i32_0 = arith.constant 0 : i32
    return %arg0, %c0_i32 : i32, i32
  }
}

</mosaic_0001>

<llo_original>
// kernel: bcq_forward.1
$region0: #{bcq_forward.1}
  #allocation0 [shape = 'u32[]', space=smem, size = 0x4, offset = 0x4, fixed_abs, tag = 'smem constant byte address 0x4 - core index']
  #allocation1 [shape = 'u32[72,128]{1,0:T(1,128)}', space=vmem, size = 0x9000, scoped, tag = 'internal scratch']
  #allocation2 [shape = 'f32[64,16]{1,0:T(8,128)}', space=vmem, size = 0x8000, scoped, tag = 'scratch operand']
  %s0 = inlined_call_operand.vmem [shape: f32[64,32], index: 0, kind: input, shape index: {}]
  %s1 = inlined_call_operand.vmem [shape: f32[32,256], index: 1, kind: input, shape index: {}]
  %s2 = inlined_call_operand.vmem [shape: f32[1,256], index: 2, kind: input, shape index: {}]
  %s3 = inlined_call_operand.vmem [shape: f32[256,16], index: 3, kind: input, shape index: {}]
  %s4 = inlined_call_operand.vmem [shape: f32[1,16], index: 4, kind: input, shape index: {}]
  %s5 = inlined_call_operand.vmem [shape: f32[8,128], index: 5, kind: output, shape index: {}]
  %s6 = sld [smem:[#allocation0]]
  $region30: #{bcq_forward.1} parent=0
    _
  %s8 = ssub.s32 1, %s6
  %s9 = scalar_select 0, %s8, %s6
  // Predicated region
  $region2: #{bcq_forward.1} parent=0 // pred_check
    _
  $region3: #{bcq_forward.1} parent=0 // pred_check_branch
    %11 = sbr.rel (0) target = $region5
  $region4: #{bcq_forward.1} parent=0 // pred_region
    _
  $region5: #{bcq_forward.1} parent=0 // pred_fallthru
    _
  // Predicated region
  $region6: #{bcq_forward.1} parent=0 // pred_check
    _
  $region7: #{bcq_forward.1} parent=0 // pred_check_branch
    %13 = sbr.rel (0) target = $region9
  $region8: #{bcq_forward.1} parent=0 // pred_region
    _
  $region9: #{bcq_forward.1} parent=0 // pred_fallthru
    _
  // Predicated region
  $region10: #{bcq_forward.1} parent=0 // pred_check
    _
  $region11: #{bcq_forward.1} parent=0 // pred_check_branch
    %15 = sbr.rel (0) target = $region13
  $region12: #{bcq_forward.1} parent=0 // pred_region
    _
  $region13: #{bcq_forward.1} parent=0 // pred_fallthru
    _
  // Predicated region
  $region14: #{bcq_forward.1} parent=0 // pred_check
    _
  $region15: #{bcq_forward.1} parent=0 // pred_check_branch
    %17 = sbr.rel (0) target = $region17
  $region16: #{bcq_forward.1} parent=0 // pred_region
    _
  $region17: #{bcq_forward.1} parent=0 // pred_fallthru
    _
  // Predicated region
  $region18: #{bcq_forward.1} parent=0 // pred_check
    _
  $region19: #{bcq_forward.1} parent=0 // pred_check_branch
    %19 = sbr.rel (0) target = $region21
  $region20: #{bcq_forward.1} parent=0 // pred_region
    _
  $region21: #{bcq_forward.1} parent=0 // pred_fallthru
    _
  %v20 = vld [vmem:[%s0] sm:$0xff]
  %v21 = vld [vmem:[%s0 + $0x8] sm:$0xff]
  %v22 = vld [vmem:[%s0 + $0x10] sm:$0xff]
  %v23 = vld [vmem:[%s0 + $0x18] sm:$0xff]
  %v24 = vld [vmem:[%s0 + $0x20] sm:$0xff]
  %v25 = vld [vmem:[%s0 + $0x28] sm:$0xff]
  %v26 = vld [vmem:[%s0 + $0x30] sm:$0xff]
  %v27 = vld [vmem:[%s0 + $0x38] sm:$0xff]
  %v28 = vld [vmem:[%s1] sm:$0xff]
  %v29 = vld [vmem:[%s1 + $0x8] sm:$0xff]
  %v30 = vld [vmem:[%s1 + $0x10] sm:$0xff]
  %v31 = vld [vmem:[%s1 + $0x18] sm:$0xff]
  %v32 = vld [vmem:[%s1 + $0x20] sm:$0xff]
  %v33 = vld [vmem:[%s1 + $0x28] sm:$0xff]
  %v34 = vld [vmem:[%s1 + $0x30] sm:$0xff]
  %v35 = vld [vmem:[%s1 + $0x38] sm:$0xff]
  %v36 = vld [vmem:[%s2] sm:$0x3]
  %v38 = vperm.slane %v36, 0
  %v39 = vperm.slane %v36, 1
  %vm42 = vcmask 261120
  %v44 = vsel %vm42, %v20, 0
  %v47 = vsel %vm42, %v21, 0
  %v50 = vsel %vm42, %v22, 0
  %v53 = vsel %vm42, %v23, 0
  %v56 = vsel %vm42, %v24, 0
  %v59 = vsel %vm42, %v25, 0
  %v62 = vsel %vm42, %v26, 0
  %v65 = vsel %vm42, %v27, 0
  %67 = vmatpush.msra.mxu0 0.0
  %68 = vmatpush.msra.mxu0 0.0
  %69 = vmatpush.msra.mxu0 0.0
  %70 = vmatpush.msra.mxu0 0.0
  %71 = vmatpush.msra.mxu0 0.0
  %72 = vmatpush.msra.mxu0 0.0
  %73 = vmatpush.msra.mxu0 0.0
  %74 = vmatpush.msra.mxu0 0.0
  %75 = vmatpush.msra.mxu0 0.0
  %76 = vmatpush.msra.mxu0 0.0
  %77 = vmatpush.msra.mxu0 0.0
  %78 = vmatpush.msra.mxu0 0.0
  %79 = vmatpush.msra.mxu0 %v34
  %80 = vmatpush.msra.mxu0 %v32
  %81 = vmatpush.msra.mxu0 %v30
  %82 = vmatpush.msra.mxu0 %v28
  %83 = vmatmul.f32.gmra.mxu0 %v44
  %v84 = vpop.f32.mrf.mxu0
  %v85 = vadd.f32 %v38, %v84
  %86 = vmatmul.f32.gmra.mxu0 %v47
  %v87 = vpop.f32.mrf.mxu0
  %v88 = vadd.f32 %v38, %v87
  %89 = vmatmul.f32.gmra.mxu0 %v50
  %v90 = vpop.f32.mrf.mxu0
  %v91 = vadd.f32 %v38, %v90
  %92 = vmatmul.f32.gmra.mxu0 %v53
  %v93 = vpop.f32.mrf.mxu0
  %v94 = vadd.f32 %v38, %v93
  %95 = vmatmul.f32.gmra.mxu0 %v56
  %v96 = vpop.f32.mrf.mxu0
  %v97 = vadd.f32 %v38, %v96
  %98 = vmatmul.f32.gmra.mxu0 %v59
  %v99 = vpop.f32.mrf.mxu0
  %v100 = vadd.f32 %v38, %v99
  %101 = vmatmul.f32.gmra.mxu0 %v62
  %v102 = vpop.f32.mrf.mxu0
  %v103 = vadd.f32 %v38, %v102
  %104 = vmatmul.f32.gmra.mxu0 %v65
  %v105 = vpop.f32.mrf.mxu0
  %v106 = vadd.f32 %v38, %v105
  %107 = vdwg.mxu0
  %108 = vmatpush.msra.mxu0 0.0
  %109 = vmatpush.msra.mxu0 0.0
  %110 = vmatpush.msra.mxu0 0.0
  %111 = vmatpush.msra.mxu0 0.0
  %112 = vmatpush.msra.mxu0 0.0
  %113 = vmatpush.msra.mxu0 0.0
  %114 = vmatpush.msra.mxu0 0.0
  %115 = vmatpush.msra.mxu0 0.0
  %116 = vmatpush.msra.mxu0 0.0
  %117 = vmatpush.msra.mxu0 0.0
  %118 = vmatpush.msra.mxu0 0.0
  %119 = vmatpush.msra.mxu0 0.0
  %120 = vmatpush.msra.mxu0 %v35
  %121 = vmatpush.msra.mxu0 %v33
  %122 = vmatpush.msra.mxu0 %v31
  %123 = vmatpush.msra.mxu0 %v29
  %124 = vmatmul.f32.gmra.mxu0 %v44
  %v125 = vpop.f32.mrf.mxu0
  %v126 = vadd.f32 %v39, %v125
  %127 = vmatmul.f32.gmra.mxu0 %v47
  %v128 = vpop.f32.mrf.mxu0
  %v129 = vadd.f32 %v39, %v128
  %130 = vmatmul.f32.gmra.mxu0 %v50
  %v131 = vpop.f32.mrf.mxu0
  %v132 = vadd.f32 %v39, %v131
  %133 = vmatmul.f32.gmra.mxu0 %v53
  %v134 = vpop.f32.mrf.mxu0
  %v135 = vadd.f32 %v39, %v134
  %136 = vmatmul.f32.gmra.mxu0 %v56
  %v137 = vpop.f32.mrf.mxu0
  %v138 = vadd.f32 %v39, %v137
  %139 = vmatmul.f32.gmra.mxu0 %v59
  %v140 = vpop.f32.mrf.mxu0
  %v141 = vadd.f32 %v39, %v140
  %142 = vmatmul.f32.gmra.mxu0 %v62
  %v143 = vpop.f32.mrf.mxu0
  %v144 = vadd.f32 %v39, %v143
  %145 = vmatmul.f32.gmra.mxu0 %v65
  %v146 = vpop.f32.mrf.mxu0
  %v147 = vadd.f32 %v39, %v146
  %148 = vdwg.mxu0
  %v149 = vmax.f32 %v85, 0.0
  %v150 = vmax.f32 %v126, 0.0
  %v151 = vmax.f32 %v88, 0.0
  %v152 = vmax.f32 %v129, 0.0
  %v153 = vmax.f32 %v91, 0.0
  %v154 = vmax.f32 %v132, 0.0
  %v155 = vmax.f32 %v94, 0.0
  %v156 = vmax.f32 %v135, 0.0
  %v157 = vmax.f32 %v97, 0.0
  %v158 = vmax.f32 %v138, 0.0
  %v159 = vmax.f32 %v100, 0.0
  %v160 = vmax.f32 %v141, 0.0
  %v161 = vmax.f32 %v103, 0.0
  %v162 = vmax.f32 %v144, 0.0
  %v163 = vmax.f32 %v106, 0.0
  %v164 = vmax.f32 %v147, 0.0
  %v165 = vld [vmem:[%s3] sm:$0xff]
  %v166 = vld [vmem:[%s3 + $0x8] sm:$0xff]
  %v167 = vld [vmem:[%s3 + $0x10] sm:$0xff]
  %v168 = vld [vmem:[%s3 + $0x18] sm:$0xff]
  %v169 = vld [vmem:[%s3 + $0x20] sm:$0xff]
  %v170 = vld [vmem:[%s3 + $0x28] sm:$0xff]
  %v171 = vld [vmem:[%s3 + $0x30] sm:$0xff]
  %v172 = vld [vmem:[%s3 + $0x38] sm:$0xff]
  %v173 = vld [vmem:[%s3 + $0x40] sm:$0xff]
  %v174 = vld [vmem:[%s3 + $0x48] sm:$0xff]
  %v175 = vld [vmem:[%s3 + $0x50] sm:$0xff]
  %v176 = vld [vmem:[%s3 + $0x58] sm:$0xff]
  %v177 = vld [vmem:[%s3 + $0x60] sm:$0xff]
  %v178 = vld [vmem:[%s3 + $0x68] sm:$0xff]
  %v179 = vld [vmem:[%s3 + $0x70] sm:$0xff]
  %v180 = vld [vmem:[%s3 + $0x78] sm:$0xff]
  %v181 = vld [vmem:[%s3 + $0x80] sm:$0xff]
  %v182 = vld [vmem:[%s3 + $0x88] sm:$0xff]
  %v183 = vld [vmem:[%s3 + $0x90] sm:$0xff]
  %v184 = vld [vmem:[%s3 + $0x98] sm:$0xff]
  %v185 = vld [vmem:[%s3 + $0xa0] sm:$0xff]
  %v186 = vld [vmem:[%s3 + $0xa8] sm:$0xff]
  %v187 = vld [vmem:[%s3 + $0xb0] sm:$0xff]
  %v188 = vld [vmem:[%s3 + $0xb8] sm:$0xff]
  %v189 = vld [vmem:[%s3 + $0xc0] sm:$0xff]
  %v190 = vld [vmem:[%s3 + $0xc8] sm:$0xff]
  %v191 = vld [vmem:[%s3 + $0xd0] sm:$0xff]
  %v192 = vld [vmem:[%s3 + $0xd8] sm:$0xff]
  %v193 = vld [vmem:[%s3 + $0xe0] sm:$0xff]
  %v194 = vld [vmem:[%s3 + $0xe8] sm:$0xff]
  %v195 = vld [vmem:[%s3 + $0xf0] sm:$0xff]
  %v196 = vld [vmem:[%s3 + $0xf8] sm:$0xff]
  %v197 = vld [vmem:[%s4] sm:$0x1]
  %v199 = vperm.slane %v197, 0
  %201 = vmatpush.msra.mxu0 %v180
  %202 = vmatpush.msra.mxu0 %v179
  %203 = vmatpush.msra.mxu0 %v178
  %204 = vmatpush.msra.mxu0 %v177
  %205 = vmatpush.msra.mxu0 %v176
  %206 = vmatpush.msra.mxu0 %v175
  %207 = vmatpush.msra.mxu0 %v174
  %208 = vmatpush.msra.mxu0 %v173
  %209 = vmatpush.msra.mxu0 %v172
  %210 = vmatpush.msra.mxu0 %v171
  %211 = vmatpush.msra.mxu0 %v170
  %212 = vmatpush.msra.mxu0 %v169
  %213 = vmatpush.msra.mxu0 %v168
  %214 = vmatpush.msra.mxu0 %v167
  %215 = vmatpush.msra.mxu0 %v166
  %216 = vmatpush.msra.mxu0 %v165
  %217 = vmatmul.f32.gmra.mxu0 %v149
  %v218 = vpop.f32.mrf.mxu0
  %v219 = vadd.f32 %v199, %v218
  %220 = vmatmul.f32.gmra.mxu0 %v151
  %v221 = vpop.f32.mrf.mxu0
  %v222 = vadd.f32 %v199, %v221
  %223 = vmatmul.f32.gmra.mxu0 %v153
  %v224 = vpop.f32.mrf.mxu0
  %v225 = vadd.f32 %v199, %v224
  %226 = vmatmul.f32.gmra.mxu0 %v155
  %v227 = vpop.f32.mrf.mxu0
  %v228 = vadd.f32 %v199, %v227
  %229 = vmatmul.f32.gmra.mxu0 %v157
  %v230 = vpop.f32.mrf.mxu0
  %v231 = vadd.f32 %v199, %v230
  %232 = vmatmul.f32.gmra.mxu0 %v159
  %v233 = vpop.f32.mrf.mxu0
  %v234 = vadd.f32 %v199, %v233
  %235 = vmatmul.f32.gmra.mxu0 %v161
  %v236 = vpop.f32.mrf.mxu0
  %v237 = vadd.f32 %v199, %v236
  %238 = vmatmul.f32.gmra.mxu0 %v163
  %v239 = vpop.f32.mrf.mxu0
  %v240 = vadd.f32 %v199, %v239
  %241 = vdwg.mxu0
  %242 = vmatpush.msra.mxu0 %v196
  %243 = vmatpush.msra.mxu0 %v195
  %244 = vmatpush.msra.mxu0 %v194
  %245 = vmatpush.msra.mxu0 %v193
  %246 = vmatpush.msra.mxu0 %v192
  %247 = vmatpush.msra.mxu0 %v191
  %248 = vmatpush.msra.mxu0 %v190
  %249 = vmatpush.msra.mxu0 %v189
  %250 = vmatpush.msra.mxu0 %v188
  %251 = vmatpush.msra.mxu0 %v187
  %252 = vmatpush.msra.mxu0 %v186
  %253 = vmatpush.msra.mxu0 %v185
  %254 = vmatpush.msra.mxu0 %v184
  %255 = vmatpush.msra.mxu0 %v183
  %256 = vmatpush.msra.mxu0 %v182
  %257 = vmatpush.msra.mxu0 %v181
  %258 = vmatmul.f32.gmra.mxu0 %v150
  %v259 = vpop.f32.mrf.mxu0
  %v260 = vadd.f32 %v219, %v259
  %261 = vmatmul.f32.gmra.mxu0 %v152
  %v262 = vpop.f32.mrf.mxu0
  %v263 = vadd.f32 %v222, %v262
  %264 = vmatmul.f32.gmra.mxu0 %v154
  %v265 = vpop.f32.mrf.mxu0
  %v266 = vadd.f32 %v225, %v265
  %267 = vmatmul.f32.gmra.mxu0 %v156
  %v268 = vpop.f32.mrf.mxu0
  %v269 = vadd.f32 %v228, %v268
  %270 = vmatmul.f32.gmra.mxu0 %v158
  %v271 = vpop.f32.mrf.mxu0
  %v272 = vadd.f32 %v231, %v271
  %273 = vmatmul.f32.gmra.mxu0 %v160
  %v274 = vpop.f32.mrf.mxu0
  %v275 = vadd.f32 %v234, %v274
  %276 = vmatmul.f32.gmra.mxu0 %v162
  %v277 = vpop.f32.mrf.mxu0
  %v278 = vadd.f32 %v237, %v277
  %279 = vmatmul.f32.gmra.mxu0 %v164
  %v280 = vpop.f32.mrf.mxu0
  %v281 = vadd.f32 %v240, %v280
  %282 = vdwg.mxu0
  %v283 = vlaneseq
  %v284 = vand.u32 %v283, 127
  %vm285 = vcmp.ge.s32.totalorder %v284, 8
  %v286 = vsel %vm285, %v260, -inf
  %v287 = vsel %vm285, %v263, -inf
  %v288 = vsel %vm285, %v266, -inf
  %v289 = vsel %vm285, %v269, -inf
  %v290 = vsel %vm285, %v272, -inf
  %v291 = vsel %vm285, %v275, -inf
  %v292 = vsel %vm285, %v278, -inf
  %v293 = vsel %vm285, %v281, -inf
  %vm294 = vcmask 130048
  %v295 = vsel %vm294, %v286, -inf
  %296 = vmax.xlane.f32.xlu0 %v295
  %v297 = vpop.xlane.xlu0 %296
  %v298 = vsel %vm294, %v287, -inf
  %299 = vmax.xlane.f32.xlu0 %v298
  %v300 = vpop.xlane.xlu0 %299
  %v301 = vsel %vm294, %v288, -inf
  %302 = vmax.xlane.f32.xlu0 %v301
  %v303 = vpop.xlane.xlu0 %302
  %v304 = vsel %vm294, %v289, -inf
  %305 = vmax.xlane.f32.xlu0 %v304
  %v306 = vpop.xlane.xlu0 %305
  %v307 = vsel %vm294, %v290, -inf
  %308 = vmax.xlane.f32.xlu0 %v307
  %v309 = vpop.xlane.xlu0 %308
  %v310 = vsel %vm294, %v291, -inf
  %311 = vmax.xlane.f32.xlu0 %v310
  %v312 = vpop.xlane.xlu0 %311
  %v313 = vsel %vm294, %v292, -inf
  %314 = vmax.xlane.f32.xlu0 %v313
  %v315 = vpop.xlane.xlu0 %314
  %v316 = vsel %vm294, %v293, -inf
  %317 = vmax.xlane.f32.xlu0 %v316
  %v318 = vpop.xlane.xlu0 %317
  %v319 = vsub.f32 %v286, %v297
  %v320 = vsub.f32 %v287, %v300
  %v321 = vsub.f32 %v288, %v303
  %v322 = vsub.f32 %v289, %v306
  %v323 = vsub.f32 %v290, %v309
  %v324 = vsub.f32 %v291, %v312
  %v325 = vsub.f32 %v292, %v315
  %v326 = vsub.f32 %v293, %v318
  %v327 = vmul.f32 %v319, 1.442695
  %v328 = vpow.pop %v327
  %v329 = vmul.f32 %v320, 1.442695
  %v330 = vpow.pop %v329
  %v331 = vmul.f32 %v321, 1.442695
  %v332 = vpow.pop %v331
  %v333 = vmul.f32 %v322, 1.442695
  %v334 = vpow.pop %v333
  %v335 = vmul.f32 %v323, 1.442695
  %v336 = vpow.pop %v335
  %v337 = vmul.f32 %v324, 1.442695
  %v338 = vpow.pop %v337
  %v339 = vmul.f32 %v325, 1.442695
  %v340 = vpow.pop %v339
  %v341 = vmul.f32 %v326, 1.442695
  %v342 = vpow.pop %v341
  %v343 = vsel %vm294, %v328, 0.0
  %344 = vadd.xlane.f32.xlu0 %v343
  %v345 = vpop.xlane.xlu0 %344
  %v346 = vsel %vm294, %v330, 0.0
  %347 = vadd.xlane.f32.xlu0 %v346
  %v348 = vpop.xlane.xlu0 %347
  %v349 = vsel %vm294, %v332, 0.0
  %350 = vadd.xlane.f32.xlu0 %v349
  %v351 = vpop.xlane.xlu0 %350
  %v352 = vsel %vm294, %v334, 0.0
  %353 = vadd.xlane.f32.xlu0 %v352
  %v354 = vpop.xlane.xlu0 %353
  %v355 = vsel %vm294, %v336, 0.0
  %356 = vadd.xlane.f32.xlu0 %v355
  %v357 = vpop.xlane.xlu0 %356
  %v358 = vsel %vm294, %v338, 0.0
  %359 = vadd.xlane.f32.xlu0 %v358
  %v360 = vpop.xlane.xlu0 %359
  %v361 = vsel %vm294, %v340, 0.0
  %362 = vadd.xlane.f32.xlu0 %v361
  %v363 = vpop.xlane.xlu0 %362
  %v364 = vsel %vm294, %v342, 0.0
  %365 = vadd.xlane.f32.xlu0 %v364
  %v366 = vpop.xlane.xlu0 %365
  %v367 = vlog2.pop %v345
  %v368 = vmul.f32 %v367, 0.6931472
  %v369 = vlog2.pop %v348
  %v370 = vmul.f32 %v369, 0.6931472
  %v371 = vlog2.pop %v351
  %v372 = vmul.f32 %v371, 0.6931472
  %v373 = vlog2.pop %v354
  %v374 = vmul.f32 %v373, 0.6931472
  %v375 = vlog2.pop %v357
  %v376 = vmul.f32 %v375, 0.6931472
  %v377 = vlog2.pop %v360
  %v378 = vmul.f32 %v377, 0.6931472
  %v379 = vlog2.pop %v363
  %v380 = vmul.f32 %v379, 0.6931472
  %v381 = vlog2.pop %v366
  %v382 = vmul.f32 %v381, 0.6931472
  %v383 = vsub.f32 %v260, %v297
  %v384 = vsub.f32 %v263, %v300
  %v385 = vsub.f32 %v266, %v303
  %v386 = vsub.f32 %v269, %v306
  %v387 = vsub.f32 %v272, %v309
  %v388 = vsub.f32 %v275, %v312
  %v389 = vsub.f32 %v278, %v315
  %v390 = vsub.f32 %v281, %v318
  %v391 = vsub.f32 %v383, %v368
  %v392 = vsub.f32 %v384, %v370
  %v393 = vsub.f32 %v385, %v372
  %v394 = vsub.f32 %v386, %v374
  %v395 = vsub.f32 %v387, %v376
  %v396 = vsub.f32 %v388, %v378
  %v397 = vsub.f32 %v389, %v380
  %v398 = vsub.f32 %v390, %v382
  %v399 = vsel %vm285, %v391, %v260
  %v400 = vsel %vm285, %v392, %v263
  %v401 = vsel %vm285, %v393, %v266
  %v402 = vsel %vm285, %v394, %v269
  %v403 = vsel %vm285, %v395, %v272
  %v404 = vsel %vm285, %v396, %v275
  %v405 = vsel %vm285, %v397, %v278
  %v406 = vsel %vm285, %v398, %v281
  %407 = vst.msk [vmem:[#allocation2] sm:$0xff] %vm294, %v399
  %408 = vst.msk [vmem:[#allocation2 + $0x8] sm:$0xff] %vm294, %v400
  %409 = vst.msk [vmem:[#allocation2 + $0x10] sm:$0xff] %vm294, %v401
  %410 = vst.msk [vmem:[#allocation2 + $0x18] sm:$0xff] %vm294, %v402
  %411 = vst.msk [vmem:[#allocation2 + $0x20] sm:$0xff] %vm294, %v403
  %412 = vst.msk [vmem:[#allocation2 + $0x28] sm:$0xff] %vm294, %v404
  %413 = vst.msk [vmem:[#allocation2 + $0x30] sm:$0xff] %vm294, %v405
  %414 = vst.msk [vmem:[#allocation2 + $0x38] sm:$0xff] %vm294, %v406
  %v415 = vld [vmem:[#allocation2] ss:$8 sm:$0xf]
  %v416 = vld [vmem:[#allocation2] ss:$8 sm:$0xf0]
  %v417 = vor.u32 %v415, %v416
  %418 = vst.msk [vmem:[%s5] sm:$0xff] %vm294, %v417
  %s419 = scalar_lea.vmem [#allocation2], 1
  %v420 = vld [vmem:[%s419] ss:$8 sm:$0xf]
  %v421 = vld [vmem:[%s419] ss:$8 sm:$0xf0]
  %v422 = vor.u32 %v420, %v421
  %424 = vrot.lane.b32.xlu0 %v422, 16
  %v425 = vpop.permute.xlu0 %424
  %vm427 = vcmask 261248
  %428 = vst.msk [vmem:[%s5] sm:$0xff] %vm427, %v425
  %s429 = scalar_lea.vmem [#allocation2], 2
  %v430 = vld [vmem:[%s429] ss:$8 sm:$0xf]
  %v431 = vld [vmem:[%s429] ss:$8 sm:$0xf0]
  %v432 = vor.u32 %v430, %v431
  %434 = vrot.lane.b32.xlu0 %v432, 32
  %v435 = vpop.permute.xlu0 %434
  %vm437 = vcmask 392448
  %438 = vst.msk [vmem:[%s5] sm:$0xff] %vm437, %v435
  %s439 = scalar_lea.vmem [#allocation2], 3
  %v440 = vld [vmem:[%s439] ss:$8 sm:$0xf]
  %v441 = vld [vmem:[%s439] ss:$8 sm:$0xf0]
  %v442 = vor.u32 %v440, %v441
  %444 = vrot.lane.b32.xlu0 %v442, 48
  %v445 = vpop.permute.xlu0 %444
  %vm447 = vcmask 523648
  %448 = vst.msk [vmem:[%s5] sm:$0xff] %vm447, %v445
  %s449 = scalar_lea.vmem [#allocation2], 4
  %v450 = vld [vmem:[%s449] ss:$8 sm:$0xf]
  %v451 = vld [vmem:[%s449] ss:$8 sm:$0xf0]
  %v452 = vor.u32 %v450, %v451
  %454 = vrot.lane.b32.xlu0 %v452, 64
  %v455 = vpop.permute.xlu0 %454
  %vm457 = vcmask 654848
  %458 = vst.msk [vmem:[%s5] sm:$0xff] %vm457, %v455
  %s459 = scalar_lea.vmem [#allocation2], 5
  %v460 = vld [vmem:[%s459] ss:$8 sm:$0xf]
  %v461 = vld [vmem:[%s459] ss:$8 sm:$0xf0]
  %v462 = vor.u32 %v460, %v461
  %464 = vrot.lane.b32.xlu0 %v462, 80
  %v465 = vpop.permute.xlu0 %464
  %vm467 = vcmask 786048
  %468 = vst.msk [vmem:[%s5] sm:$0xff] %vm467, %v465
  %s469 = scalar_lea.vmem [#allocation2], 6
  %v470 = vld [vmem:[%s469] ss:$8 sm:$0xf]
  %v471 = vld [vmem:[%s469] ss:$8 sm:$0xf0]
  %v472 = vor.u32 %v470, %v471
  %474 = vrot.lane.b32.xlu0 %v472, 96
  %v475 = vpop.permute.xlu0 %474
  %vm477 = vcmask 917248
  %478 = vst.msk [vmem:[%s5] sm:$0xff] %vm477, %v475
  %s479 = scalar_lea.vmem [#allocation2], 7
  %v480 = vld [vmem:[%s479] ss:$8 sm:$0xf]
  %v481 = vld [vmem:[%s479] ss:$8 sm:$0xf0]
  %v482 = vor.u32 %v480, %v481
  %484 = vrot.lane.b32.xlu0 %v482, 112
  %v485 = vpop.permute.xlu0 %484
  %vm487 = vcmask 1048448
  %488 = vst.msk [vmem:[%s5] sm:$0xff] %vm487, %v485
  // Predicated region
  $region22: #{bcq_forward.1} parent=0 // pred_check
    _
  $region23: #{bcq_forward.1} parent=0 // pred_check_branch
    %490 = sbr.rel (0) target = $region25
  $region24: #{bcq_forward.1} parent=0 // pred_region
    _
  $region25: #{bcq_forward.1} parent=0 // pred_fallthru
    _
  // Predicated region
  $region26: #{bcq_forward.1} parent=0 // pred_check
    _
  $region27: #{bcq_forward.1} parent=0 // pred_check_branch
    %492 = sbr.rel (0) target = $region29
  $region28: #{bcq_forward.1} parent=0 // pred_region
    _
  $region29: #{bcq_forward.1} parent=0 // pred_fallthru
    _

</llo_original>
